<compile_context>
chip_gen: v7x
topology: tpu7x:2x2x1
jax: 0.10.0
libtpu: 0.0.40
codegen_flags: <defaults>
</compile_context>

<pallas_src>
import functools
import math

import jax
import jax.numpy as jnp
from jax.experimental import pallas as pl
from jax.experimental.pallas import tpu as pltpu

_LANE = 128            # out-feature (N / lane) dims padded to this
_SUBLANE_BF16 = 16     # a bf16 vreg holds [16, 128]: batch tiles in multiples of 16
_MAX_BATCH_TILE = 1024
_MIN_ROWS_FOR_SPLIT = 128   # force >=2 grid steps (v7x megacore) above this


def _round_up(x, m):
    return ((x + m - 1) // m) * m


def _cdiv(a, b):
    return -(-a // b)


def _fused_mlp_kernel(*refs, n_layers, tanh_bf16):
    """refs = (x, w0, b0, w1, b1, ..., w_{L-1}, b_{L-1}, out).

    x / w_i are bf16 MXU operands, b_i are f32, out is bf16.  The running
    activation never leaves the kernel.

    Padding invariant: only out-feature (N) dims are zero-padded.  Padded W
    columns and padded bias lanes are zero, so the padded activation lanes
    are tanh(0) == 0 and contribute nothing to the next layer's contraction.
    NOTE: this relies on the activation being zero-preserving (f(0) == 0);
    swapping tanh for an activation with f(0) != 0 would corrupt the padded
    lanes feeding the next layer's K dim.
    """
    x_ref = refs[0]
    o_ref = refs[-1]
    act = x_ref[...]                                   # bf16 (TM, in_dim)
    for i in range(n_layers):
        w = refs[1 + 2 * i][...]                       # bf16 (K_i, N_i_pad)
        b = refs[2 + 2 * i][...]                       # f32  (1,  N_i_pad)
        # MXU matmul with f32 accumulation; bias add in f32.
        y = jnp.dot(act, w, preferred_element_type=jnp.float32) + b
        if i < n_layers - 1:
            if tanh_bf16:
                # v6e/v7x: bf16 EUP/VALU path (~2x vreg throughput).
                act = jnp.tanh(y.astype(jnp.bfloat16))
            else:
                # v5e: no bf16 VPU/EUP -> keep tanh in f32.
                act = jnp.tanh(y).astype(jnp.bfloat16)
        else:
            o_ref[...] = y.astype(o_ref.dtype)         # lane-dense bf16 store


def _fused_mlp_call(x_pad, ws, bs, *, batch_tile, tanh_bf16):
    """One pallas_call over a batch grid; weights/biases resident across it."""
    n_layers = len(ws)
    batch_pad, in_dim = x_pad.shape
    dout_pad = ws[-1].shape[1]
    grid = (batch_pad // batch_tile,)

    # x tiled over batch; weights/biases are VMEM-resident (constant block
    # index, so Pallas does not re-DMA them between consecutive grid steps).
    in_specs = [pl.BlockSpec((batch_tile, in_dim), lambda i: (i, 0))]
    for w, b in zip(ws, bs):
        in_specs.append(pl.BlockSpec(w.shape, lambda i: (0, 0)))
        in_specs.append(pl.BlockSpec(b.shape, lambda i: (0, 0)))
    out_specs = pl.BlockSpec((batch_tile, dout_pad), lambda i: (i, 0))

    # Advisory cost hint for the XLA scheduler.
    flops = 2 * batch_pad * sum(int(w.shape[0]) * int(w.shape[1]) for w in ws)
    transcendentals = batch_pad * sum(int(w.shape[1]) for w in ws[:-1])
    bytes_accessed = (
        int(x_pad.size) * 2
        + sum(int(w.size) * 2 for w in ws)
        + sum(int(b.size) * 4 for b in bs)
        + batch_pad * dout_pad * 2
    )

    # VMEM budget from the actual buffers (x2 for double-buffered pipeline
    # slots), plus 2x headroom for compiler scratch.
    # TODO(synk): for very large resident layers on v7x (64 MiB VMEM), switch
    # weight specs to pipeline_mode=pl.Buffered(1) or add an N-dim grid axis.
    x_tile_bytes = batch_tile * max(in_dim, _LANE) * 2        # bf16, lane-padded layout
    out_tile_bytes = batch_tile * dout_pad * 2                # bf16
    w_bytes = sum(int(w.size) * 2 for w in ws)                # bf16
    b_bytes = sum(8 * int(b.shape[1]) * 4 for b in bs)        # (1,N) f32 pads to 8 sublanes
    need = 2 * (x_tile_bytes + out_tile_bytes + w_bytes + b_bytes)
    vmem_limit = int(min(64 << 20, max(16 << 20, 2 * need)))

    flat_args = [x_pad]
    for w, b in zip(ws, bs):
        flat_args.extend((w, b))

    kernel = functools.partial(_fused_mlp_kernel, n_layers=n_layers,
                               tanh_bf16=tanh_bf16)
    return pl.pallas_call(
        kernel,
        out_shape=jax.ShapeDtypeStruct((batch_pad, dout_pad), jnp.bfloat16),
        grid=grid,
        in_specs=in_specs,
        out_specs=out_specs,
        compiler_params=pltpu.CompilerParams(
            dimension_semantics=("parallel",),     # megacore batch split (v7x)
            vmem_limit_bytes=vmem_limit,
        ),
        cost_estimate=pl.CostEstimate(
            flops=int(flops),
            transcendentals=int(transcendentals),
            bytes_accessed=int(bytes_accessed),
        ),
    )(*flat_args)


def _pick_batch_tile(batch):
    """Divisor-aware batch tile: multiple of 16, last tile not mostly padding,
    and >=2 grid steps when there's enough work so both v7x TCs get fed."""
    bp = _round_up(batch, _SUBLANE_BF16)
    n_tiles = _cdiv(bp, _MAX_BATCH_TILE)
    if bp >= _MIN_ROWS_FOR_SPLIT:
        n_tiles = max(n_tiles, 2)
    tile = _round_up(_cdiv(bp, n_tiles), _SUBLANE_BF16)
    tile = min(tile, _MAX_BATCH_TILE)
    batch_pad = tile * _cdiv(bp, tile)
    return tile, batch_pad


def _padded_forward(x, ws, bs, *, output_dim, tanh_bf16):
    """Pad only the batch axis, run the fused kernel, slice the real output."""
    batch, _ = x.shape
    batch_tile, batch_pad = _pick_batch_tile(batch)

    # bf16 cast + batch pad fuse inside this jit (no zeros+scatter HBM pass).
    x_bf = x.astype(jnp.bfloat16)
    if batch_pad != batch:
        x_bf = jnp.pad(x_bf, ((0, batch_pad - batch), (0, 0)))

    out_pad = _fused_mlp_call(x_bf, ws, bs, batch_tile=batch_tile,
                              tanh_bf16=tanh_bf16)
    # Slice + f32 cast remain fused in the same jit; kernel writeback is bf16.
    return out_pad[:batch, :output_dim].astype(jnp.float32)


class FullyConnectedNNPallas:
    """JAX/Pallas mirror of the PyTorch FullyConnectedNN module (tanh)."""
    # TODO(synk): logging (getLogger / architecture printout) intentionally omitted.

    def __init__(self, input_dim, hidden_layers, output_dim, key):
        layer_sizes = ([int(input_dim)] + [int(h) for h in hidden_layers]
                       + [int(output_dim)])
        self.input_dim = int(input_dim)
        self.output_dim = int(output_dim)
        self.params = []        # f32 (in, out), (1, out) — reference copies
        ws_pad, bs_pad = [], []
        for i in range(len(layer_sizes) - 1):
            fan_in = layer_sizes[i]
            fan_out = layer_sizes[i + 1]
            key, wk, bk = jax.random.split(key, 3)
            # nn.Linear default init: U(-1/sqrt(fan_in), 1/sqrt(fan_in))
            bound = 1.0 / math.sqrt(fan_in)
            w = jax.random.uniform(wk, (fan_in, fan_out), jnp.float32,
                                   minval=-bound, maxval=bound)
            b = jax.random.uniform(bk, (1, fan_out), jnp.float32,
                                   minval=-bound, maxval=bound)
            self.params.append((w, b))

            # K (in-feature) dim: real size for layer 0, previous layer's
            # padded N for deeper layers.  N (out-feature) dim: padded to 128
            # so matmul outputs and stores stay lane-dense.
            din_p = fan_in if i == 0 else _round_up(fan_in, _LANE)
            dout_p = _round_up(fan_out, _LANE)
            w_p = jnp.zeros((din_p, dout_p), jnp.bfloat16)
            w_p = w_p.at[:fan_in, :fan_out].set(w.astype(jnp.bfloat16))
            b_p = jnp.zeros((1, dout_p), jnp.float32)
            b_p = b_p.at[:, :fan_out].set(b)
            ws_pad.append(w_p)
            bs_pad.append(b_p)

        self.ws_pad = tuple(ws_pad)
        self.bs_pad = tuple(bs_pad)

        # bf16 tanh path on v6e/v7x; f32 on v5e (no bf16 VPU/EUP there).
        try:
            kind = jax.devices()[0].device_kind.lower()
        except Exception:
            kind = ""
        tanh_bf16 = "v5" not in kind

        self._jit_forward = jax.jit(functools.partial(
            _padded_forward, output_dim=self.output_dim, tanh_bf16=tanh_bf16))

    def __call__(self, x):
        return self._jit_forward(x, self.ws_pad, self.bs_pad)


def _reference_forward(params, x):
    n = len(params)
    for i, (w, b) in enumerate(params):
        x = x @ w + b
        if i < n - 1:
            x = jnp.tanh(x)
    return x


if __name__ == "__main__":
    key = jax.random.PRNGKey(0)
    key, xkey, pkey = jax.random.split(key, 3)

    input_dim, hidden_layers, output_dim = 16, [32, 32], 8
    batch = 8

    model = FullyConnectedNNPallas(input_dim, hidden_layers, output_dim, pkey)
    x = jax.random.normal(xkey, (batch, input_dim), jnp.float32)

    out = jax.block_until_ready(model(x))

    ref = _reference_forward(model.params, x)
    assert out.shape == (batch, output_dim)
    # bf16 MXU operands + bf16 writeback -> loosened tolerance vs f32 reference.
    assert jnp.allclose(out, ref, atol=2e-2, rtol=2e-2), (
        f"max abs err = {jnp.max(jnp.abs(out - ref))}"
    )

    print("KERNEL_OK")
</pallas_src>

<mosaic_0001>
module attributes {stable_mosaic.version = 11 : i64} {
  func.func @_fused_mlp_kernel(%arg0: i32, %arg1: memref<16x16xbf16, #tpu.memory_space<vmem>>, %arg2: memref<16x128xbf16, #tpu.memory_space<vmem>>, %arg3: memref<1x128xf32, #tpu.memory_space<vmem>>, %arg4: memref<128x128xbf16, #tpu.memory_space<vmem>>, %arg5: memref<1x128xf32, #tpu.memory_space<vmem>>, %arg6: memref<128x128xbf16, #tpu.memory_space<vmem>>, %arg7: memref<1x128xf32, #tpu.memory_space<vmem>>, %arg8: memref<16x128xbf16, #tpu.memory_space<vmem>>) attributes {dimension_semantics = [#tpu.dimension_semantics<parallel>], iteration_bounds = array<i64: 1>, scalar_prefetch = 0 : i64, scratch_operands = 0 : i64, tpu.core_type = #tpu.core_type<tc>, window_params = [{transform_indices = @transform_0, window_bounds = array<i64: 16, 16>}, {pipeline_mode = #tpu.pipeline_mode<synchronous>, transform_indices = @transform_1, window_bounds = array<i64: 16, 128>}, {pipeline_mode = #tpu.pipeline_mode<synchronous>, transform_indices = @transform_2, window_bounds = array<i64: 1, 128>}, {pipeline_mode = #tpu.pipeline_mode<synchronous>, transform_indices = @transform_3, window_bounds = array<i64: 128, 128>}, {pipeline_mode = #tpu.pipeline_mode<synchronous>, transform_indices = @transform_4, window_bounds = array<i64: 1, 128>}, {pipeline_mode = #tpu.pipeline_mode<synchronous>, transform_indices = @transform_5, window_bounds = array<i64: 128, 128>}, {pipeline_mode = #tpu.pipeline_mode<synchronous>, transform_indices = @transform_6, window_bounds = array<i64: 1, 128>}, {transform_indices = @transform_7, window_bounds = array<i64: 16, 128>}]} {
    %c0 = arith.constant 0 : index
    %c0_0 = arith.constant 0 : index
    %0 = vector.load %arg1[%c0, %c0_0] : memref<16x16xbf16, #tpu.memory_space<vmem>>, vector<16x16xbf16>
    %c0_1 = arith.constant 0 : index
    %c0_2 = arith.constant 0 : index
    %1 = vector.load %arg2[%c0_1, %c0_2] : memref<16x128xbf16, #tpu.memory_space<vmem>>, vector<16x128xbf16>
    %c0_3 = arith.constant 0 : index
    %c0_4 = arith.constant 0 : index
    %2 = vector.load %arg3[%c0_3, %c0_4] : memref<1x128xf32, #tpu.memory_space<vmem>>, vector<1x128xf32>
    %cst = arith.constant dense<0.000000e+00> : vector<16x128xf32>
    %3 = tpu.matmul %0, %1, %cst {dimension_numbers = #tpu.dot_dimension_numbers<[1], [0], [0], [1], [0, 0, 1, 1], [], []>} : vector<16x16xbf16>, vector<16x128xbf16>, vector<16x128xf32> -> vector<16x128xf32>
    %4 = vector.broadcast %2 : vector<1x128xf32> to vector<16x128xf32>
    %5 = arith.addf %3, %4 : vector<16x128xf32>
    %6 = arith.truncf %5 : vector<16x128xf32> to vector<16x128xbf16>
    %7 = math.tanh %6 : vector<16x128xbf16>
    %c0_5 = arith.constant 0 : index
    %c0_6 = arith.constant 0 : index
    %8 = vector.load %arg4[%c0_5, %c0_6] : memref<128x128xbf16, #tpu.memory_space<vmem>>, vector<128x128xbf16>
    %c0_7 = arith.constant 0 : index
    %c0_8 = arith.constant 0 : index
    %9 = vector.load %arg5[%c0_7, %c0_8] : memref<1x128xf32, #tpu.memory_space<vmem>>, vector<1x128xf32>
    %cst_9 = arith.constant dense<0.000000e+00> : vector<16x128xf32>
    %10 = tpu.matmul %7, %8, %cst_9 {dimension_numbers = #tpu.dot_dimension_numbers<[1], [0], [0], [1], [0, 0, 1, 1], [], []>} : vector<16x128xbf16>, vector<128x128xbf16>, vector<16x128xf32> -> vector<16x128xf32>
    %11 = vector.broadcast %9 : vector<1x128xf32> to vector<16x128xf32>
    %12 = arith.addf %10, %11 : vector<16x128xf32>
    %13 = arith.truncf %12 : vector<16x128xf32> to vector<16x128xbf16>
    %14 = math.tanh %13 : vector<16x128xbf16>
    %c0_10 = arith.constant 0 : index
    %c0_11 = arith.constant 0 : index
    %15 = vector.load %arg6[%c0_10, %c0_11] : memref<128x128xbf16, #tpu.memory_space<vmem>>, vector<128x128xbf16>
    %c0_12 = arith.constant 0 : index
    %c0_13 = arith.constant 0 : index
    %16 = vector.load %arg7[%c0_12, %c0_13] : memref<1x128xf32, #tpu.memory_space<vmem>>, vector<1x128xf32>
    %cst_14 = arith.constant dense<0.000000e+00> : vector<16x128xf32>
    %17 = tpu.matmul %14, %15, %cst_14 {dimension_numbers = #tpu.dot_dimension_numbers<[1], [0], [0], [1], [0, 0, 1, 1], [], []>} : vector<16x128xbf16>, vector<128x128xbf16>, vector<16x128xf32> -> vector<16x128xf32>
    %18 = vector.broadcast %16 : vector<1x128xf32> to vector<16x128xf32>
    %19 = arith.addf %17, %18 : vector<16x128xf32>
    %20 = arith.truncf %19 : vector<16x128xf32> to vector<16x128xbf16>
    %c0_15 = arith.constant 0 : index
    %c0_16 = arith.constant 0 : index
    %21 = vector.load %arg8[%c0_15, %c0_16] : memref<16x128xbf16, #tpu.memory_space<vmem>>, vector<16x128xbf16>
    tpu.vector_store %arg8[%c0_15, %c0_16], %20 {strides = array<i32>} : memref<16x128xbf16, #tpu.memory_space<vmem>>, vector<16x128xbf16>,
    return
  }
  func.func @transform_0(%arg0: i32) -> (i32, i32) {
    %c0_i32 = arith.constant 0 : i32
    %c0_i32_0 = arith.constant 0 : i32
    return %arg0, %c0_i32 : i32, i32
  }
  func.func @transform_1(%arg0: i32) -> (i32, i32) {
    %c0_i32 = arith.constant 0 : i32
    %c0_i32_0 = arith.constant 0 : i32
    %c0_i32_1 = arith.constant 0 : i32
    return %c0_i32, %c0_i32_0 : i32, i32
  }
  func.func @transform_2(%arg0: i32) -> (i32, i32) {
    %c0_i32 = arith.constant 0 : i32
    %c0_i32_0 = arith.constant 0 : i32
    %c0_i32_1 = arith.constant 0 : i32
    return %c0_i32, %c0_i32_0 : i32, i32
  }
  func.func @transform_3(%arg0: i32) -> (i32, i32) {
    %c0_i32 = arith.constant 0 : i32
    %c0_i32_0 = arith.constant 0 : i32
    %c0_i32_1 = arith.constant 0 : i32
    return %c0_i32, %c0_i32_0 : i32, i32
  }
  func.func @transform_4(%arg0: i32) -> (i32, i32) {
    %c0_i32 = arith.constant 0 : i32
    %c0_i32_0 = arith.constant 0 : i32
    %c0_i32_1 = arith.constant 0 : i32
    return %c0_i32, %c0_i32_0 : i32, i32
  }
  func.func @transform_5(%arg0: i32) -> (i32, i32) {
    %c0_i32 = arith.constant 0 : i32
    %c0_i32_0 = arith.constant 0 : i32
    %c0_i32_1 = arith.constant 0 : i32
    return %c0_i32, %c0_i32_0 : i32, i32
  }
  func.func @transform_6(%arg0: i32) -> (i32, i32) {
    %c0_i32 = arith.constant 0 : i32
    %c0_i32_0 = arith.constant 0 : i32
    %c0_i32_1 = arith.constant 0 : i32
    return %c0_i32, %c0_i32_0 : i32, i32
  }
  func.func @transform_7(%arg0: i32) -> (i32, i32) {
    %c0_i32 = arith.constant 0 : i32
    %c0_i32_0 = arith.constant 0 : i32
    return %arg0, %c0_i32 : i32, i32
  }
}

</mosaic_0001>

<llo_original>
// kernel: _padded_forward.1
$region0: #{_padded_forward.1}
  #allocation0 [shape = 'u32[]', space=smem, size = 0x4, offset = 0x4, fixed_abs, tag = 'smem constant byte address 0x4 - core index']
  #allocation1 [shape = 'u32[144,128]{1,0:T(1,128)}', space=vmem, size = 0x12000, scoped, tag = 'internal scratch']
  %s0 = inlined_call_operand.vmem [shape: bf16[16,16], index: 0, kind: input, shape index: {}]
  %s1 = inlined_call_operand.vmem [shape: bf16[16,128], index: 1, kind: input, shape index: {}]
  %s2 = inlined_call_operand.vmem [shape: f32[1,128], index: 2, kind: input, shape index: {}]
  %s3 = inlined_call_operand.hbm [shape: bf16[128,128], index: 3, kind: input, shape index: {}]
  %s4 = inlined_call_operand.vmem [shape: f32[1,128], index: 4, kind: input, shape index: {}]
  %s5 = inlined_call_operand.hbm [shape: bf16[128,128], index: 5, kind: input, shape index: {}]
  %s6 = inlined_call_operand.vmem [shape: f32[1,128], index: 6, kind: input, shape index: {}]
  %s7 = inlined_call_operand.vmem [shape: bf16[16,128], index: 7, kind: output, shape index: {}]
  %s8 = sld [smem:[#allocation0]]
  $region46: #{_padded_forward.1} parent=0
    _
  %s10 = ssub.s32 1, %s8
  %s11 = scalar_select 0, %s10, %s8
  $region1: #{_padded_forward.1} parent=0
    #allocation2 [shape = 'u8[32768]{0}', space=vmem, size = 0x8000, scoped, tag = 'input window, operand 3, single buffered']
    #allocation3 [shape = 's32[1]{0}', space=sflag, size = 0x4, scoped, tag = 'scoped memory for _padded_forward.1']
    #allocation4 [shape = 'u8[32768]{0}', space=vmem, size = 0x8000, scoped, tag = 'input window, operand 5, single buffered']
    #allocation5 [shape = 's32[1]{0}', space=sflag, size = 0x4, scoped, tag = 'scoped memory for _padded_forward.1']
    %12 = vsyncpa [#allocation3], 0
    %13 = vsyncpa [#allocation5], 0
    // Predicated region
    $region2: #{_padded_forward.1} parent=1 // pred_check
      _
    $region3: #{_padded_forward.1} parent=1 // pred_check_branch
      %15 = sbr.rel (0) target = $region5
    $region4: #{_padded_forward.1} parent=1 // pred_region
      _
    $region5: #{_padded_forward.1} parent=1 // pred_fallthru
      _
    // Predicated region
    $region6: #{_padded_forward.1} parent=1 // pred_check
      _
    $region7: #{_padded_forward.1} parent=1 // pred_check_branch
      %17 = sbr.rel (0) target = $region9
    $region8: #{_padded_forward.1} parent=1 // pred_region
      _
    $region9: #{_padded_forward.1} parent=1 // pred_fallthru
      _
    // Predicated region
    $region10: #{_padded_forward.1} parent=1 // pred_check
      _
    $region11: #{_padded_forward.1} parent=1 // pred_check_branch
      %19 = sbr.rel (0) target = $region13
    $region12: #{_padded_forward.1} parent=1 // pred_region
      _
    $region13: #{_padded_forward.1} parent=1 // pred_fallthru
      _
    // Predicated region
    $region14: #{_padded_forward.1} parent=1 // pred_check
      _
    $region15: #{_padded_forward.1} parent=1 // pred_check_branch
      %21 = sbr.rel (0) target = $region17
    $region16: #{_padded_forward.1} parent=1 // pred_region
      %s23 = ssub.s32 1024, 1024
      %24 = vsyncadd [#allocation3], %s23
      %s25 = sshll.u32 [#allocation2], 4
      %s26 = int_to_ptr.vmem [resolvable:$true] %s25
      %31 = dma.hbm_to_vmem [thread:$0]  %s3, 1024, %s26, [#allocation3], 64, 64, 4
    $region17: #{_padded_forward.1} parent=1 // pred_fallthru
      _
    // Predicated region
    $region18: #{_padded_forward.1} parent=1 // pred_check
      _
    $region19: #{_padded_forward.1} parent=1 // pred_check_branch
      %33 = sbr.rel (0) target = $region21
    $region20: #{_padded_forward.1} parent=1 // pred_region
      _
    $region21: #{_padded_forward.1} parent=1 // pred_fallthru
      _
    // Predicated region
    $region22: #{_padded_forward.1} parent=1 // pred_check
      _
    $region23: #{_padded_forward.1} parent=1 // pred_check_branch
      %35 = sbr.rel (0) target = $region25
    $region24: #{_padded_forward.1} parent=1 // pred_region
      %s37 = ssub.s32 1024, 1024
      %38 = vsyncadd [#allocation5], %s37
      %s39 = sshll.u32 [#allocation4], 4
      %s40 = int_to_ptr.vmem [resolvable:$true] %s39
      %45 = dma.hbm_to_vmem [thread:$0]  %s5, 1024, %s40, [#allocation5], 64, 64, 4
    $region25: #{_padded_forward.1} parent=1 // pred_fallthru
      _
    // Predicated region
    $region26: #{_padded_forward.1} parent=1 // pred_check
      _
    $region27: #{_padded_forward.1} parent=1 // pred_check_branch
      %47 = sbr.rel (0) target = $region29
    $region28: #{_padded_forward.1} parent=1 // pred_region
      _
    $region29: #{_padded_forward.1} parent=1 // pred_fallthru
      _
    // Predicated region
    $region30: #{_padded_forward.1} parent=1 // pred_check
      _
    $region31: #{_padded_forward.1} parent=1 // pred_check_branch
      %49 = sbr.rel (0) target = $region33
    $region32: #{_padded_forward.1} parent=1 // pred_region
      %50 = dma.done [#allocation3], 1024
    $region33: #{_padded_forward.1} parent=1 // pred_fallthru
      _
    // Predicated region
    $region34: #{_padded_forward.1} parent=1 // pred_check
      _
    $region35: #{_padded_forward.1} parent=1 // pred_check_branch
      %52 = sbr.rel (0) target = $region37
    $region36: #{_padded_forward.1} parent=1 // pred_region
      %53 = dma.done [#allocation5], 1024
    $region37: #{_padded_forward.1} parent=1 // pred_fallthru
      _
    %v55 = vld [vmem:[%s0] sm:$0xf]
    %v56 = vld [vmem:[%s0 + $0x4] sm:$0xf]
    %v57 = vld [vmem:[%s1] sm:$0xf]
    %v58 = vld [vmem:[%s1 + $0x4] sm:$0xf]
    %v59 = vld [vmem:[%s2] sm:$0x1]
    %v61 = vlaneseq
    %v62 = vshrl.u32 %v61, 7
    %v63 = vsub.s32 0, %v62
    %v64 = vrot.slane %v59, %v63
    %v68 = vunpack.c.l.b16 %v55
    %v69 = vunpack.c.l.b16 %v56
    %v70 = vpack.c.b16 %v69, %v68
    %v73 = vunpack.c.l.b16 %v57
    %v74 = vunpack.c.l.b16 %v58
    %v75 = vpack.c.b16 %v74, %v73
    %vm77 = vcmask 130048
    %v79 = vsel %vm77, %v70, 0
    %81 = vmatprep.subr.bf16.mxu0 0
    %82 = vmatpush1.bf16.msra.mxu0 %v75
    %83 = vmatprep.subr.bf16.mxu0 0
    %84 = vmatpush1.bf16.msra.mxu0 0
    %85 = vmatprep.subr.bf16.mxu0 0
    %86 = vmatpush1.bf16.msra.mxu0 0
    %87 = vmatprep.subr.bf16.mxu0 0
    %88 = vmatpush1.bf16.msra.mxu0 0
    %89 = vmatprep.subr.bf16.mxu0 0
    %90 = vmatpush1.bf16.msra.mxu0 0
    %91 = vmatprep.subr.bf16.mxu0 0
    %92 = vmatpush1.bf16.msra.mxu0 0
    %93 = vmatprep.subr.bf16.mxu0 0
    %94 = vmatpush1.bf16.msra.mxu0 0
    %95 = vmatprep.subr.bf16.mxu0 0
    %96 = vmatpush1.bf16.msra.mxu0 0
    %97 = vmatprep.subr.bf16.mxu0 0
    %98 = vmatpush1.bf16.msra.mxu0 0
    %99 = vmatprep.subr.bf16.mxu0 0
    %100 = vmatpush1.bf16.msra.mxu0 0
    %101 = vmatprep.subr.bf16.mxu0 0
    %102 = vmatpush1.bf16.msra.mxu0 0
    %103 = vmatprep.subr.bf16.mxu0 0
    %104 = vmatpush1.bf16.msra.mxu0 0
    %105 = vmatprep.subr.bf16.mxu0 0
    %106 = vmatpush1.bf16.msra.mxu0 0
    %107 = vmatprep.subr.bf16.mxu0 0
    %108 = vmatpush1.bf16.msra.mxu0 0
    %109 = vmatprep.subr.bf16.mxu0 0
    %110 = vmatpush1.bf16.msra.mxu0 0
    %111 = vmatprep.subr.bf16.mxu0 0
    %112 = vmatpush1.bf16.msra.mxu0 0
    %113 = vmatprep.mubr.bf16.mxu0 0
    %114 = vmatmul.mubr.bf16.gmra.mrb[0].mxu0 %v79
    %v115 = vpop.f32.mrb[0].mxu0
    %v116 = vadd.f32 %v64, %v115
    %v117 = vpop.f32.mrb[0].mxu0
    %v118 = vpop.f32.mrb[0].mxu0
    %v119 = vadd.f32 %v64, %v118
    %v120 = vpop.f32.mrb[0].mxu0
    %121 = vdwg.mxu0
    %v122 = vpack.c.bf16 %v119, %v116
    %v123 = vtanh.bf16.pop %v122
    %v124 = vld [vmem:[#allocation2] sm:$0xf]
    %v125 = vld [vmem:[#allocation2 + $0x4] sm:$0xf]
    %v126 = vld [vmem:[#allocation2 + $0x8] sm:$0xf]
    %v127 = vld [vmem:[#allocation2 + $0xc] sm:$0xf]
    %v128 = vld [vmem:[#allocation2 + $0x10] sm:$0xf]
    %v129 = vld [vmem:[#allocation2 + $0x14] sm:$0xf]
    %v130 = vld [vmem:[#allocation2 + $0x18] sm:$0xf]
    %v131 = vld [vmem:[#allocation2 + $0x1c] sm:$0xf]
    %v132 = vld [vmem:[#allocation2 + $0x20] sm:$0xf]
    %v133 = vld [vmem:[#allocation2 + $0x24] sm:$0xf]
    %v134 = vld [vmem:[#allocation2 + $0x28] sm:$0xf]
    %v135 = vld [vmem:[#allocation2 + $0x2c] sm:$0xf]
    %v136 = vld [vmem:[#allocation2 + $0x30] sm:$0xf]
    %v137 = vld [vmem:[#allocation2 + $0x34] sm:$0xf]
    %v138 = vld [vmem:[#allocation2 + $0x38] sm:$0xf]
    %v139 = vld [vmem:[#allocation2 + $0x3c] sm:$0xf]
    %v140 = vld [vmem:[%s4] sm:$0x1]
    %v142 = vlaneseq
    %v143 = vshrl.u32 %v142, 7
    %v144 = vsub.s32 0, %v143
    %v145 = vrot.slane %v140, %v144
    %v163 = vunpack.c.l.b16 %v124
    %v164 = vunpack.c.l.b16 %v125
    %v165 = vunpack.c.l.b16 %v126
    %v166 = vunpack.c.l.b16 %v127
    %v167 = vunpack.c.l.b16 %v128
    %v168 = vunpack.c.l.b16 %v129
    %v169 = vunpack.c.l.b16 %v130
    %v170 = vunpack.c.l.b16 %v131
    %v171 = vunpack.c.l.b16 %v132
    %v172 = vunpack.c.l.b16 %v133
    %v173 = vunpack.c.l.b16 %v134
    %v174 = vunpack.c.l.b16 %v135
    %v175 = vunpack.c.l.b16 %v136
    %v176 = vunpack.c.l.b16 %v137
    %v177 = vunpack.c.l.b16 %v138
    %v178 = vunpack.c.l.b16 %v139
    %v179 = vpack.c.b16 %v164, %v163
    %v180 = vpack.c.b16 %v166, %v165
    %v181 = vpack.c.b16 %v168, %v167
    %v182 = vpack.c.b16 %v170, %v169
    %v183 = vpack.c.b16 %v172, %v171
    %v184 = vpack.c.b16 %v174, %v173
    %v185 = vpack.c.b16 %v176, %v175
    %v186 = vpack.c.b16 %v178, %v177
    %195 = vmatprep.subr.bf16.mxu0 0
    %196 = vmatpush1.bf16.msra.mxu0 %v179
    %197 = vmatprep.subr.bf16.mxu0 0
    %198 = vmatpush1.bf16.msra.mxu0 %v180
    %199 = vmatprep.subr.bf16.mxu0 0
    %200 = vmatpush1.bf16.msra.mxu0 %v181
    %201 = vmatprep.subr.bf16.mxu0 0
    %202 = vmatpush1.bf16.msra.mxu0 %v182
    %203 = vmatprep.subr.bf16.mxu0 0
    %204 = vmatpush1.bf16.msra.mxu0 %v183
    %205 = vmatprep.subr.bf16.mxu0 0
    %206 = vmatpush1.bf16.msra.mxu0 %v184
    %207 = vmatprep.subr.bf16.mxu0 0
    %208 = vmatpush1.bf16.msra.mxu0 %v185
    %209 = vmatprep.subr.bf16.mxu0 0
    %210 = vmatpush1.bf16.msra.mxu0 %v186
    %211 = vmatprep.subr.bf16.mxu0 0
    %212 = vmatpush1.bf16.msra.mxu0 0
    %213 = vmatprep.subr.bf16.mxu0 0
    %214 = vmatpush1.bf16.msra.mxu0 0
    %215 = vmatprep.subr.bf16.mxu0 0
    %216 = vmatpush1.bf16.msra.mxu0 0
    %217 = vmatprep.subr.bf16.mxu0 0
    %218 = vmatpush1.bf16.msra.mxu0 0
    %219 = vmatprep.subr.bf16.mxu0 0
    %220 = vmatpush1.bf16.msra.mxu0 0
    %221 = vmatprep.subr.bf16.mxu0 0
    %222 = vmatpush1.bf16.msra.mxu0 0
    %223 = vmatprep.subr.bf16.mxu0 0
    %224 = vmatpush1.bf16.msra.mxu0 0
    %225 = vmatprep.subr.bf16.mxu0 0
    %226 = vmatpush1.bf16.msra.mxu0 0
    %227 = vmatprep.mubr.bf16.mxu0 0
    %228 = vmatmul.mubr.bf16.gmra.mrb[0].mxu0 %v123
    %v229 = vpop.f32.mrb[0].mxu0
    %v230 = vadd.f32 %v145, %v229
    %v231 = vpop.f32.mrb[0].mxu0
    %v232 = vpop.f32.mrb[0].mxu0
    %v233 = vadd.f32 %v145, %v232
    %v234 = vpop.f32.mrb[0].mxu0
    %235 = vdwg.mxu0
    %v236 = vpack.c.bf16 %v233, %v230
    %v237 = vtanh.bf16.pop %v236
    %v238 = vld [vmem:[#allocation4] sm:$0xf]
    %v239 = vld [vmem:[#allocation4 + $0x4] sm:$0xf]
    %v240 = vld [vmem:[#allocation4 + $0x8] sm:$0xf]
    %v241 = vld [vmem:[#allocation4 + $0xc] sm:$0xf]
    %v242 = vld [vmem:[#allocation4 + $0x10] sm:$0xf]
    %v243 = vld [vmem:[#allocation4 + $0x14] sm:$0xf]
    %v244 = vld [vmem:[#allocation4 + $0x18] sm:$0xf]
    %v245 = vld [vmem:[#allocation4 + $0x1c] sm:$0xf]
    %v246 = vld [vmem:[#allocation4 + $0x20] sm:$0xf]
    %v247 = vld [vmem:[#allocation4 + $0x24] sm:$0xf]
    %v248 = vld [vmem:[#allocation4 + $0x28] sm:$0xf]
    %v249 = vld [vmem:[#allocation4 + $0x2c] sm:$0xf]
    %v250 = vld [vmem:[#allocation4 + $0x30] sm:$0xf]
    %v251 = vld [vmem:[#allocation4 + $0x34] sm:$0xf]
    %v252 = vld [vmem:[#allocation4 + $0x38] sm:$0xf]
    %v253 = vld [vmem:[#allocation4 + $0x3c] sm:$0xf]
    %v254 = vld [vmem:[%s6] sm:$0x1]
    %v256 = vlaneseq
    %v257 = vshrl.u32 %v256, 7
    %v258 = vsub.s32 0, %v257
    %v259 = vrot.slane %v254, %v258
    %v277 = vunpack.c.l.b16 %v238
    %v278 = vunpack.c.l.b16 %v239
    %v279 = vunpack.c.l.b16 %v240
    %v280 = vunpack.c.l.b16 %v241
    %v281 = vunpack.c.l.b16 %v242
    %v282 = vunpack.c.l.b16 %v243
    %v283 = vunpack.c.l.b16 %v244
    %v284 = vunpack.c.l.b16 %v245
    %v285 = vunpack.c.l.b16 %v246
    %v286 = vunpack.c.l.b16 %v247
    %v287 = vunpack.c.l.b16 %v248
    %v288 = vunpack.c.l.b16 %v249
    %v289 = vunpack.c.l.b16 %v250
    %v290 = vunpack.c.l.b16 %v251
    %v291 = vunpack.c.l.b16 %v252
    %v292 = vunpack.c.l.b16 %v253
    %v293 = vpack.c.b16 %v278, %v277
    %v294 = vpack.c.b16 %v280, %v279
    %v295 = vpack.c.b16 %v282, %v281
    %v296 = vpack.c.b16 %v284, %v283
    %v297 = vpack.c.b16 %v286, %v285
    %v298 = vpack.c.b16 %v288, %v287
    %v299 = vpack.c.b16 %v290, %v289
    %v300 = vpack.c.b16 %v292, %v291
    %309 = vmatprep.subr.bf16.mxu0 0
    %310 = vmatpush1.bf16.msra.mxu0 %v293
    %311 = vmatprep.subr.bf16.mxu0 0
    %312 = vmatpush1.bf16.msra.mxu0 %v294
    %313 = vmatprep.subr.bf16.mxu0 0
    %314 = vmatpush1.bf16.msra.mxu0 %v295
    %315 = vmatprep.subr.bf16.mxu0 0
    %316 = vmatpush1.bf16.msra.mxu0 %v296
    %317 = vmatprep.subr.bf16.mxu0 0
    %318 = vmatpush1.bf16.msra.mxu0 %v297
    %319 = vmatprep.subr.bf16.mxu0 0
    %320 = vmatpush1.bf16.msra.mxu0 %v298
    %321 = vmatprep.subr.bf16.mxu0 0
    %322 = vmatpush1.bf16.msra.mxu0 %v299
    %323 = vmatprep.subr.bf16.mxu0 0
    %324 = vmatpush1.bf16.msra.mxu0 %v300
    %325 = vmatprep.subr.bf16.mxu0 0
    %326 = vmatpush1.bf16.msra.mxu0 0
    %327 = vmatprep.subr.bf16.mxu0 0
    %328 = vmatpush1.bf16.msra.mxu0 0
    %329 = vmatprep.subr.bf16.mxu0 0
    %330 = vmatpush1.bf16.msra.mxu0 0
    %331 = vmatprep.subr.bf16.mxu0 0
    %332 = vmatpush1.bf16.msra.mxu0 0
    %333 = vmatprep.subr.bf16.mxu0 0
    %334 = vmatpush1.bf16.msra.mxu0 0
    %335 = vmatprep.subr.bf16.mxu0 0
    %336 = vmatpush1.bf16.msra.mxu0 0
    %337 = vmatprep.subr.bf16.mxu0 0
    %338 = vmatpush1.bf16.msra.mxu0 0
    %339 = vmatprep.subr.bf16.mxu0 0
    %340 = vmatpush1.bf16.msra.mxu0 0
    %341 = vmatprep.mubr.bf16.mxu0 0
    %342 = vmatmul.mubr.bf16.gmra.mrb[0].mxu0 %v237
    %v343 = vpop.f32.mrb[0].mxu0
    %v344 = vadd.f32 %v259, %v343
    %v345 = vpop.f32.mrb[0].mxu0
    %v346 = vpop.f32.mrb[0].mxu0
    %v347 = vadd.f32 %v259, %v346
    %v348 = vpop.f32.mrb[0].mxu0
    %349 = vdwg.mxu0
    %v350 = vpack.c.bf16 %v347, %v344
    %v352 = vunpack.c.l.b16 %v350
    %v353 = vunpack.c.h.b16 %v350
    %v354 = vpack.c.b16 %v352, %v352
    %v355 = vpack.c.b16 %v353, %v353
    %358 = vst [vmem:[%s7] sm:$0xf] %v354
    %359 = vst [vmem:[%s7 + $0x4] sm:$0xf] %v355
    // Predicated region
    $region38: #{_padded_forward.1} parent=1 // pred_check
      _
    $region39: #{_padded_forward.1} parent=1 // pred_check_branch
      %361 = sbr.rel (0) target = $region41
    $region40: #{_padded_forward.1} parent=1 // pred_region
      _
    $region41: #{_padded_forward.1} parent=1 // pred_fallthru
      _
    // Predicated region
    $region42: #{_padded_forward.1} parent=1 // pred_check
      _
    $region43: #{_padded_forward.1} parent=1 // pred_check_branch
      %363 = sbr.rel (0) target = $region45
    $region44: #{_padded_forward.1} parent=1 // pred_region
      _
    $region45: #{_padded_forward.1} parent=1 // pred_fallthru
      _
    %364 = vsyncpa [#allocation3], 1
    %365 = vsyncpa [#allocation5], 1

</llo_original>
